<compile_context>
chip_gen: v6e
topology: v6e:2x2x1
jax: 0.10.0
libtpu: 0.0.40
codegen_flags: <defaults>
</compile_context>

<pallas_src>
import jax
import jax.numpy as jnp
from jax.experimental import pallas as pl
from jax.experimental.pallas import tpu as pltpu


def _policy_kernel(x_ref, w1_ref, b1_ref, w2_ref, b2_ref, w3_ref, b3_ref,
                   wh_ref, bh_ref, out_ref):
    # Layer 1: Linear + ReLU
    h = jnp.dot(x_ref[...], w1_ref[...], preferred_element_type=jnp.float32)
    h = jnp.maximum(h + b1_ref[...], 0.0)
    # Layer 2: Linear + ReLU
    h = jnp.dot(h, w2_ref[...], preferred_element_type=jnp.float32)
    h = jnp.maximum(h + b2_ref[...], 0.0)
    # Layer 3: Linear + Tanh
    h = jnp.dot(h, w3_ref[...], preferred_element_type=jnp.float32)
    h = jnp.tanh(h + b3_ref[...])
    # Fused heads: [Bt, H] @ [H, 2*A]  ->  [mean | std]
    o = jnp.dot(h, wh_ref[...], preferred_element_type=jnp.float32)
    out_ref[...] = (o + bh_ref[...]).astype(out_ref.dtype)


def policy_network_forward(state, params):
    """Pallas implementation of Policy_Network.forward(state) -> (mean, std)."""
    w1, b1, w2, b2, w3, b3, w_mean, b_mean, w_std, b_std = params
    B, S = state.shape
    H = w1.shape[1]
    A = w_mean.shape[1]

    # Fuse the two heads into a single matmul (denser output, one store).
    wh = jnp.concatenate([w_mean, w_std], axis=1)   # [H, 2A]
    bh = jnp.concatenate([b_mean, b_std], axis=1)   # [1, 2A]

    # Batch tiling: blocks of up to 512 rows, multiple of 8 (sublane constraint).
    Bt = min(512, max(8, B))
    Bt = ((Bt + 7) // 8) * 8
    n_blocks = pl.cdiv(B, Bt)
    Bp = n_blocks * Bt
    x = state if Bp == B else jnp.pad(state, ((0, Bp - B), (0, 0)))

    resident = lambda a: pl.BlockSpec(a.shape, lambda i: (0, 0))

    flops = 2 * Bp * (S * H + 2 * H * H + H * 2 * A)
    bytes_accessed = 4 * (Bp * S + Bp * 2 * A
                          + S * H + H + 2 * (H * H + H) + H * 2 * A + 2 * A)
    cost = pl.CostEstimate(flops=flops, transcendentals=Bp * H,
                           bytes_accessed=bytes_accessed)

    out = pl.pallas_call(
        _policy_kernel,
        out_shape=jax.ShapeDtypeStruct((Bp, 2 * A), jnp.float32),
        grid=(n_blocks,),
        in_specs=[
            pl.BlockSpec((Bt, S), lambda i: (i, 0)),   # activations: tiled over batch
            resident(w1), resident(b1),                # weights/biases: VMEM-resident
            resident(w2), resident(b2),
            resident(w3), resident(b3),
            resident(wh), resident(bh),
        ],
        out_specs=pl.BlockSpec((Bt, 2 * A), lambda i: (i, 0)),
        compiler_params=pltpu.CompilerParams(
            dimension_semantics=("parallel",)),        # megacore sharding on v7x
        cost_estimate=cost,
    )(x, w1, b1, w2, b2, w3, b3, wh, bh)

    out = out[:B]
    return out[:, :A], out[:, A:]


def init_params(key, state_dim, hidden_dim, action_dim):
    """Mimic torch.nn.Linear default init U(-1/sqrt(fan_in), 1/sqrt(fan_in)).
    Weights stored transposed as [in, out]."""
    dims = [(state_dim, hidden_dim),    # shared_net[0]
            (hidden_dim, hidden_dim),   # shared_net[2]
            (hidden_dim, hidden_dim),   # shared_net[4]
            (hidden_dim, action_dim),   # mean_layer
            (hidden_dim, action_dim)]   # std_layer
    params = []
    for (fan_in, fan_out) in dims:
        key, kw, kb = jax.random.split(key, 3)
        bound = 1.0 / (fan_in ** 0.5)
        w = jax.random.uniform(kw, (fan_in, fan_out), jnp.float32, -bound, bound)
        b = jax.random.uniform(kb, (1, fan_out), jnp.float32, -bound, bound)
        params.extend([w, b])
    return tuple(params)


def policy_network_reference(state, params):
    """Plain-JAX reference for correctness checking."""
    w1, b1, w2, b2, w3, b3, w_mean, b_mean, w_std, b_std = params
    h = jnp.maximum(state @ w1 + b1, 0.0)
    h = jnp.maximum(h @ w2 + b2, 0.0)
    h = jnp.tanh(h @ w3 + b3)
    return h @ w_mean + b_mean, h @ w_std + b_std


if __name__ == "__main__":
    B = 8
    state_dim, hidden_dim, action_dim = 8, 32, 4

    key = jax.random.PRNGKey(0)
    kp, ks = jax.random.split(key, 2)
    params = init_params(kp, state_dim, hidden_dim, action_dim)
    state = jax.random.normal(ks, (B, state_dim), jnp.float32)

    mean, std = policy_network_forward(state, params)
    mean = jax.block_until_ready(mean)
    std = jax.block_until_ready(std)

    mean_ref, std_ref = policy_network_reference(state, params)
    assert mean.shape == (B, action_dim), mean.shape
    assert std.shape == (B, action_dim), std.shape
    assert jnp.allclose(mean, mean_ref, atol=1e-4, rtol=1e-4), (mean, mean_ref)
    assert jnp.allclose(std, std_ref, atol=1e-4, rtol=1e-4), (std, std_ref)

    print("KERNEL_OK")
</pallas_src>

<mosaic_0001>
module attributes {stable_mosaic.version = 11 : i64} {
  func.func @_policy_kernel(%arg0: i32, %arg1: memref<8x8xf32, #tpu.memory_space<vmem>>, %arg2: memref<8x32xf32, #tpu.memory_space<vmem>>, %arg3: memref<1x32xf32, #tpu.memory_space<vmem>>, %arg4: memref<32x32xf32, #tpu.memory_space<vmem>>, %arg5: memref<1x32xf32, #tpu.memory_space<vmem>>, %arg6: memref<32x32xf32, #tpu.memory_space<vmem>>, %arg7: memref<1x32xf32, #tpu.memory_space<vmem>>, %arg8: memref<32x8xf32, #tpu.memory_space<vmem>>, %arg9: memref<1x8xf32, #tpu.memory_space<vmem>>, %arg10: memref<8x8xf32, #tpu.memory_space<vmem>>) attributes {dimension_semantics = [#tpu.dimension_semantics<parallel>], iteration_bounds = array<i64: 1>, scalar_prefetch = 0 : i64, scratch_operands = 0 : i64, tpu.core_type = #tpu.core_type<tc>, window_params = [{transform_indices = @transform_0, window_bounds = array<i64: 8, 8>}, {pipeline_mode = #tpu.pipeline_mode<synchronous>, transform_indices = @transform_1, window_bounds = array<i64: 8, 32>}, {pipeline_mode = #tpu.pipeline_mode<synchronous>, transform_indices = @transform_2, window_bounds = array<i64: 1, 32>}, {pipeline_mode = #tpu.pipeline_mode<synchronous>, transform_indices = @transform_3, window_bounds = array<i64: 32, 32>}, {pipeline_mode = #tpu.pipeline_mode<synchronous>, transform_indices = @transform_4, window_bounds = array<i64: 1, 32>}, {pipeline_mode = #tpu.pipeline_mode<synchronous>, transform_indices = @transform_5, window_bounds = array<i64: 32, 32>}, {pipeline_mode = #tpu.pipeline_mode<synchronous>, transform_indices = @transform_6, window_bounds = array<i64: 1, 32>}, {pipeline_mode = #tpu.pipeline_mode<synchronous>, transform_indices = @transform_7, window_bounds = array<i64: 32, 8>}, {pipeline_mode = #tpu.pipeline_mode<synchronous>, transform_indices = @transform_8, window_bounds = array<i64: 1, 8>}, {transform_indices = @transform_9, window_bounds = array<i64: 8, 8>}]} {
    %c0 = arith.constant 0 : index
    %c0_0 = arith.constant 0 : index
    %0 = vector.load %arg1[%c0, %c0_0] : memref<8x8xf32, #tpu.memory_space<vmem>>, vector<8x8xf32>
    %c0_1 = arith.constant 0 : index
    %c0_2 = arith.constant 0 : index
    %1 = vector.load %arg2[%c0_1, %c0_2] : memref<8x32xf32, #tpu.memory_space<vmem>>, vector<8x32xf32>
    %cst = arith.constant dense<0.000000e+00> : vector<8x32xf32>
    %2 = tpu.matmul %0, %1, %cst {dimension_numbers = #tpu.dot_dimension_numbers<[1], [0], [0], [1], [0, 0, 1, 1], [], []>} : vector<8x8xf32>, vector<8x32xf32>, vector<8x32xf32> -> vector<8x32xf32>
    %c0_3 = arith.constant 0 : index
    %c0_4 = arith.constant 0 : index
    %3 = vector.load %arg3[%c0_3, %c0_4] : memref<1x32xf32, #tpu.memory_space<vmem>>, vector<1x32xf32>
    %4 = vector.broadcast %3 : vector<1x32xf32> to vector<8x32xf32>
    %5 = arith.addf %2, %4 : vector<8x32xf32>
    %cst_5 = arith.constant 0.000000e+00 : f32
    %6 = vector.broadcast %cst_5 : f32 to vector<8x32xf32>
    %7 = arith.maximumf %5, %6 : vector<8x32xf32>
    %c0_6 = arith.constant 0 : index
    %c0_7 = arith.constant 0 : index
    %8 = vector.load %arg4[%c0_6, %c0_7] : memref<32x32xf32, #tpu.memory_space<vmem>>, vector<32x32xf32>
    %cst_8 = arith.constant dense<0.000000e+00> : vector<8x32xf32>
    %9 = tpu.matmul %7, %8, %cst_8 {dimension_numbers = #tpu.dot_dimension_numbers<[1], [0], [0], [1], [0, 0, 1, 1], [], []>} : vector<8x32xf32>, vector<32x32xf32>, vector<8x32xf32> -> vector<8x32xf32>
    %c0_9 = arith.constant 0 : index
    %c0_10 = arith.constant 0 : index
    %10 = vector.load %arg5[%c0_9, %c0_10] : memref<1x32xf32, #tpu.memory_space<vmem>>, vector<1x32xf32>
    %11 = vector.broadcast %10 : vector<1x32xf32> to vector<8x32xf32>
    %12 = arith.addf %9, %11 : vector<8x32xf32>
    %cst_11 = arith.constant 0.000000e+00 : f32
    %13 = vector.broadcast %cst_11 : f32 to vector<8x32xf32>
    %14 = arith.maximumf %12, %13 : vector<8x32xf32>
    %c0_12 = arith.constant 0 : index
    %c0_13 = arith.constant 0 : index
    %15 = vector.load %arg6[%c0_12, %c0_13] : memref<32x32xf32, #tpu.memory_space<vmem>>, vector<32x32xf32>
    %cst_14 = arith.constant dense<0.000000e+00> : vector<8x32xf32>
    %16 = tpu.matmul %14, %15, %cst_14 {dimension_numbers = #tpu.dot_dimension_numbers<[1], [0], [0], [1], [0, 0, 1, 1], [], []>} : vector<8x32xf32>, vector<32x32xf32>, vector<8x32xf32> -> vector<8x32xf32>
    %c0_15 = arith.constant 0 : index
    %c0_16 = arith.constant 0 : index
    %17 = vector.load %arg7[%c0_15, %c0_16] : memref<1x32xf32, #tpu.memory_space<vmem>>, vector<1x32xf32>
    %18 = vector.broadcast %17 : vector<1x32xf32> to vector<8x32xf32>
    %19 = arith.addf %16, %18 : vector<8x32xf32>
    %20 = math.tanh %19 : vector<8x32xf32>
    %c0_17 = arith.constant 0 : index
    %c0_18 = arith.constant 0 : index
    %21 = vector.load %arg8[%c0_17, %c0_18] : memref<32x8xf32, #tpu.memory_space<vmem>>, vector<32x8xf32>
    %cst_19 = arith.constant dense<0.000000e+00> : vector<8x8xf32>
    %22 = tpu.matmul %20, %21, %cst_19 {dimension_numbers = #tpu.dot_dimension_numbers<[1], [0], [0], [1], [0, 0, 1, 1], [], []>} : vector<8x32xf32>, vector<32x8xf32>, vector<8x8xf32> -> vector<8x8xf32>
    %c0_20 = arith.constant 0 : index
    %c0_21 = arith.constant 0 : index
    %23 = vector.load %arg9[%c0_20, %c0_21] : memref<1x8xf32, #tpu.memory_space<vmem>>, vector<1x8xf32>
    %24 = vector.broadcast %23 : vector<1x8xf32> to vector<8x8xf32>
    %25 = arith.addf %22, %24 : vector<8x8xf32>
    %c0_22 = arith.constant 0 : index
    %c0_23 = arith.constant 0 : index
    %26 = vector.load %arg10[%c0_22, %c0_23] : memref<8x8xf32, #tpu.memory_space<vmem>>, vector<8x8xf32>
    tpu.vector_store %arg10[%c0_22, %c0_23], %25 {strides = array<i32>} : memref<8x8xf32, #tpu.memory_space<vmem>>, vector<8x8xf32>,
    return
  }
  func.func @transform_0(%arg0: i32) -> (i32, i32) {
    %c0_i32 = arith.constant 0 : i32
    %c0_i32_0 = arith.constant 0 : i32
    return %arg0, %c0_i32 : i32, i32
  }
  func.func @transform_1(%arg0: i32) -> (i32, i32) {
    %c0_i32 = arith.constant 0 : i32
    %c0_i32_0 = arith.constant 0 : i32
    %c0_i32_1 = arith.constant 0 : i32
    return %c0_i32, %c0_i32_0 : i32, i32
  }
  func.func @transform_2(%arg0: i32) -> (i32, i32) {
    %c0_i32 = arith.constant 0 : i32
    %c0_i32_0 = arith.constant 0 : i32
    %c0_i32_1 = arith.constant 0 : i32
    return %c0_i32, %c0_i32_0 : i32, i32
  }
  func.func @transform_3(%arg0: i32) -> (i32, i32) {
    %c0_i32 = arith.constant 0 : i32
    %c0_i32_0 = arith.constant 0 : i32
    %c0_i32_1 = arith.constant 0 : i32
    return %c0_i32, %c0_i32_0 : i32, i32
  }
  func.func @transform_4(%arg0: i32) -> (i32, i32) {
    %c0_i32 = arith.constant 0 : i32
    %c0_i32_0 = arith.constant 0 : i32
    %c0_i32_1 = arith.constant 0 : i32
    return %c0_i32, %c0_i32_0 : i32, i32
  }
  func.func @transform_5(%arg0: i32) -> (i32, i32) {
    %c0_i32 = arith.constant 0 : i32
    %c0_i32_0 = arith.constant 0 : i32
    %c0_i32_1 = arith.constant 0 : i32
    return %c0_i32, %c0_i32_0 : i32, i32
  }
  func.func @transform_6(%arg0: i32) -> (i32, i32) {
    %c0_i32 = arith.constant 0 : i32
    %c0_i32_0 = arith.constant 0 : i32
    %c0_i32_1 = arith.constant 0 : i32
    return %c0_i32, %c0_i32_0 : i32, i32
  }
  func.func @transform_7(%arg0: i32) -> (i32, i32) {
    %c0_i32 = arith.constant 0 : i32
    %c0_i32_0 = arith.constant 0 : i32
    %c0_i32_1 = arith.constant 0 : i32
    return %c0_i32, %c0_i32_0 : i32, i32
  }
  func.func @transform_8(%arg0: i32) -> (i32, i32) {
    %c0_i32 = arith.constant 0 : i32
    %c0_i32_0 = arith.constant 0 : i32
    %c0_i32_1 = arith.constant 0 : i32
    return %c0_i32, %c0_i32_0 : i32, i32
  }
  func.func @transform_9(%arg0: i32) -> (i32, i32) {
    %c0_i32 = arith.constant 0 : i32
    %c0_i32_0 = arith.constant 0 : i32
    return %arg0, %c0_i32 : i32, i32
  }
}

</mosaic_0001>

<llo_original>
// kernel: tpu_custom_call.1
$region0: #{tpu_custom_call.1}
  #allocation0 [shape = 'u32[]', space=smem, size = 0x4, offset = 0x4, fixed_abs, tag = 'smem constant byte address 0x4 - core index']
  #allocation1 [shape = 'u32[144,128]{1,0:T(1,128)}', space=vmem, size = 0x12000, scoped, tag = 'internal scratch']
  %s0 = inlined_call_operand.vmem [shape: f32[8,8], index: 0, kind: input, shape index: {}]
  %s1 = inlined_call_operand.hbm [shape: f32[8,32], index: 1, kind: input, shape index: {}]
  %s2 = inlined_call_operand.vmem [shape: f32[1,32], index: 2, kind: input, shape index: {}]
  %s3 = inlined_call_operand.vmem [shape: f32[32,32], index: 3, kind: input, shape index: {}]
  %s4 = inlined_call_operand.vmem [shape: f32[1,32], index: 4, kind: input, shape index: {}]
  %s5 = inlined_call_operand.hbm [shape: f32[32,32], index: 5, kind: input, shape index: {}]
  %s6 = inlined_call_operand.vmem [shape: f32[1,32], index: 6, kind: input, shape index: {}]
  %s7 = inlined_call_operand.vmem [shape: f32[32,8], index: 7, kind: input, shape index: {}]
  %s8 = inlined_call_operand.vmem [shape: f32[1,8], index: 8, kind: input, shape index: {}]
  %s9 = inlined_call_operand.hbm [shape: f32[8,8], index: 9, kind: output, shape index: {}]
  %s10 = sld [smem:[#allocation0]]
  $region54: #{tpu_custom_call.1} parent=0
    _
  %s12 = ssub.s32 1, %s10
  %s13 = scalar_select 0, %s12, %s10
  $region1: #{tpu_custom_call.1} parent=0
    #allocation2 [shape = 'u8[4096]{0}', space=vmem, size = 0x1000, scoped, tag = 'input window, operand 1, single buffered']
    #allocation3 [shape = 's32[1]{0}', space=sflag, size = 0x4, scoped, tag = 'scoped memory for tpu_custom_call.1']
    #allocation4 [shape = 's32[1]{0}', space=sflag, size = 0x4, scoped, tag = 'scoped memory for tpu_custom_call.1']
    #allocation5 [shape = 'u8[16384]{0}', space=vmem, size = 0x4000, scoped, tag = 'input window, operand 5, single buffered']
    #allocation6 [shape = 's32[1]{0}', space=sflag, size = 0x4, scoped, tag = 'scoped memory for tpu_custom_call.1']
    #allocation7 [shape = 'u8[4096]{0}', space=vmem, size = 0x1000, scoped, tag = 'output window, operand 0, single buffered']
    %14 = vsyncpa [#allocation3], 0
    %15 = vsyncpa [#allocation6], 0
    %16 = vsyncpa [#allocation4], 0
    // Predicated region
    $region2: #{tpu_custom_call.1} parent=1 // pred_check
      _
    $region3: #{tpu_custom_call.1} parent=1 // pred_check_branch
      %18 = sbr.rel (0) target = $region5
    $region4: #{tpu_custom_call.1} parent=1 // pred_region
      _
    $region5: #{tpu_custom_call.1} parent=1 // pred_fallthru
      _
    // Predicated region
    $region6: #{tpu_custom_call.1} parent=1 // pred_check
      _
    $region7: #{tpu_custom_call.1} parent=1 // pred_check_branch
      %20 = sbr.rel (0) target = $region9
    $region8: #{tpu_custom_call.1} parent=1 // pred_region
      %s22 = ssub.s32 128, 128
      %23 = vsyncadd [#allocation3], %s22
      %s25 = sshll.u32 [#allocation2], 4
      %s26 = int_to_ptr.vmem [resolvable:$true] %s25
      %28 = dma.hbm_to_vmem [thread:$0]  %s1, 128, %s26, [#allocation3]
    $region9: #{tpu_custom_call.1} parent=1 // pred_fallthru
      _
    // Predicated region
    $region10: #{tpu_custom_call.1} parent=1 // pred_check
      _
    $region11: #{tpu_custom_call.1} parent=1 // pred_check_branch
      %30 = sbr.rel (0) target = $region13
    $region12: #{tpu_custom_call.1} parent=1 // pred_region
      _
    $region13: #{tpu_custom_call.1} parent=1 // pred_fallthru
      _
    // Predicated region
    $region14: #{tpu_custom_call.1} parent=1 // pred_check
      _
    $region15: #{tpu_custom_call.1} parent=1 // pred_check_branch
      %32 = sbr.rel (0) target = $region17
    $region16: #{tpu_custom_call.1} parent=1 // pred_region
      _
    $region17: #{tpu_custom_call.1} parent=1 // pred_fallthru
      _
    // Predicated region
    $region18: #{tpu_custom_call.1} parent=1 // pred_check
      _
    $region19: #{tpu_custom_call.1} parent=1 // pred_check_branch
      %34 = sbr.rel (0) target = $region21
    $region20: #{tpu_custom_call.1} parent=1 // pred_region
      _
    $region21: #{tpu_custom_call.1} parent=1 // pred_fallthru
      _
    // Predicated region
    $region22: #{tpu_custom_call.1} parent=1 // pred_check
      _
    $region23: #{tpu_custom_call.1} parent=1 // pred_check_branch
      %36 = sbr.rel (0) target = $region25
    $region24: #{tpu_custom_call.1} parent=1 // pred_region
      %s38 = ssub.s32 512, 512
      %39 = vsyncadd [#allocation6], %s38
      %s40 = sshll.u32 [#allocation5], 4
      %s41 = int_to_ptr.vmem [resolvable:$true] %s40
      %46 = dma.hbm_to_vmem [thread:$0]  %s5, 512, %s41, [#allocation6], 128, 128, 8
    $region25: #{tpu_custom_call.1} parent=1 // pred_fallthru
      _
    // Predicated region
    $region26: #{tpu_custom_call.1} parent=1 // pred_check
      _
    $region27: #{tpu_custom_call.1} parent=1 // pred_check_branch
      %48 = sbr.rel (0) target = $region29
    $region28: #{tpu_custom_call.1} parent=1 // pred_region
      _
    $region29: #{tpu_custom_call.1} parent=1 // pred_fallthru
      _
    // Predicated region
    $region30: #{tpu_custom_call.1} parent=1 // pred_check
      _
    $region31: #{tpu_custom_call.1} parent=1 // pred_check_branch
      %50 = sbr.rel (0) target = $region33
    $region32: #{tpu_custom_call.1} parent=1 // pred_region
      _
    $region33: #{tpu_custom_call.1} parent=1 // pred_fallthru
      _
    // Predicated region
    $region34: #{tpu_custom_call.1} parent=1 // pred_check
      _
    $region35: #{tpu_custom_call.1} parent=1 // pred_check_branch
      %52 = sbr.rel (0) target = $region37
    $region36: #{tpu_custom_call.1} parent=1 // pred_region
      _
    $region37: #{tpu_custom_call.1} parent=1 // pred_fallthru
      _
    // Predicated region
    $region38: #{tpu_custom_call.1} parent=1 // pred_check
      _
    $region39: #{tpu_custom_call.1} parent=1 // pred_check_branch
      %54 = sbr.rel (0) target = $region41
    $region40: #{tpu_custom_call.1} parent=1 // pred_region
      %55 = dma.done [#allocation3], 128
    $region41: #{tpu_custom_call.1} parent=1 // pred_fallthru
      _
    // Predicated region
    $region42: #{tpu_custom_call.1} parent=1 // pred_check
      _
    $region43: #{tpu_custom_call.1} parent=1 // pred_check_branch
      %57 = sbr.rel (0) target = $region45
    $region44: #{tpu_custom_call.1} parent=1 // pred_region
      %58 = dma.done [#allocation6], 512
    $region45: #{tpu_custom_call.1} parent=1 // pred_fallthru
      _
    %v59 = vld [vmem:[%s0] sm:$0xff]
    %v60 = vld [vmem:[#allocation2] sm:$0xff]
    %v61 = vld [vmem:[%s2] sm:$0x1]
    %v63 = vlaneseq
    %v64 = vshrl.u32 %v63, 7
    %v65 = vsub.s32 0, %v64
    %v66 = vrot.slane %v61, %v65
    %vm68 = vcmask 64512
    %v70 = vsel %vm68, %v59, 0
    %72 = vmatprep.subr.mxu0 0.0
    %73 = vmatpush1.msra.mxu0 0.0
    %74 = vmatprep.subr.mxu0 0.0
    %75 = vmatpush1.msra.mxu0 0.0
    %76 = vmatprep.subr.mxu0 0.0
    %77 = vmatpush1.msra.mxu0 0.0
    %78 = vmatprep.subr.mxu0 0.0
    %79 = vmatpush1.msra.mxu0 0.0
    %80 = vmatprep.subr.mxu0 0.0
    %81 = vmatpush1.msra.mxu0 0.0
    %82 = vmatprep.subr.mxu0 0.0
    %83 = vmatpush1.msra.mxu0 0.0
    %84 = vmatprep.subr.mxu0 0.0
    %85 = vmatpush1.msra.mxu0 0.0
    %86 = vmatprep.subr.mxu0 0.0
    %87 = vmatpush1.msra.mxu0 0.0
    %88 = vmatprep.subr.mxu0 0.0
    %89 = vmatpush1.msra.mxu0 0.0
    %90 = vmatprep.subr.mxu0 0.0
    %91 = vmatpush1.msra.mxu0 0.0
    %92 = vmatprep.subr.mxu0 0.0
    %93 = vmatpush1.msra.mxu0 0.0
    %94 = vmatprep.subr.mxu0 0.0
    %95 = vmatpush1.msra.mxu0 0.0
    %96 = vmatprep.subr.mxu0 0.0
    %97 = vmatpush1.msra.mxu0 0.0
    %98 = vmatprep.subr.mxu0 0.0
    %99 = vmatpush1.msra.mxu0 0.0
    %100 = vmatprep.subr.mxu0 0.0
    %101 = vmatpush1.msra.mxu0 0.0
    %102 = vmatprep.subr.mxu0 0.0
    %103 = vmatpush1.msra.mxu0 %v60
    %104 = vmatprep.subr.mxu0 0.0
    %105 = vmatpush2.msra.mxu0 0.0
    %106 = vmatprep.subr.mxu0 0.0
    %107 = vmatpush2.msra.mxu0 0.0
    %108 = vmatprep.subr.mxu0 0.0
    %109 = vmatpush2.msra.mxu0 0.0
    %110 = vmatprep.subr.mxu0 0.0
    %111 = vmatpush2.msra.mxu0 0.0
    %112 = vmatprep.subr.mxu0 0.0
    %113 = vmatpush2.msra.mxu0 0.0
    %114 = vmatprep.subr.mxu0 0.0
    %115 = vmatpush2.msra.mxu0 0.0
    %116 = vmatprep.subr.mxu0 0.0
    %117 = vmatpush2.msra.mxu0 0.0
    %118 = vmatprep.subr.mxu0 0.0
    %119 = vmatpush2.msra.mxu0 0.0
    %120 = vmatprep.subr.mxu0 0.0
    %121 = vmatpush2.msra.mxu0 0.0
    %122 = vmatprep.subr.mxu0 0.0
    %123 = vmatpush2.msra.mxu0 0.0
    %124 = vmatprep.subr.mxu0 0.0
    %125 = vmatpush2.msra.mxu0 0.0
    %126 = vmatprep.subr.mxu0 0.0
    %127 = vmatpush2.msra.mxu0 0.0
    %128 = vmatprep.subr.mxu0 0.0
    %129 = vmatpush2.msra.mxu0 0.0
    %130 = vmatprep.subr.mxu0 0.0
    %131 = vmatpush2.msra.mxu0 0.0
    %132 = vmatprep.subr.mxu0 0.0
    %133 = vmatpush2.msra.mxu0 0.0
    %134 = vmatprep.subr.mxu0 0.0
    %135 = vmatpush2.msra.mxu0 0.0
    %136 = vmatprep.mubr.f32.mxu0 0.0
    %137 = vmatmul.mubr.f32.gmra.mxu0 %v70
    %v138 = vpop.f32.mrf.mxu0
    %v139 = vadd.f32 %v66, %v138
    %v140 = vpop.f32.mrf.mxu0
    %141 = vdwg.mxu0
    %v142 = vmax.f32 %v139, 0.0
    %v143 = vld [vmem:[%s3] sm:$0xff]
    %v144 = vld [vmem:[%s3 + $0x8] sm:$0xff]
    %v145 = vld [vmem:[%s3 + $0x10] sm:$0xff]
    %v146 = vld [vmem:[%s3 + $0x18] sm:$0xff]
    %v147 = vld [vmem:[%s4] sm:$0x1]
    %v149 = vlaneseq
    %v150 = vshrl.u32 %v149, 7
    %v151 = vsub.s32 0, %v150
    %v152 = vrot.slane %v147, %v151
    %vm154 = vcmask 261120
    %v156 = vsel %vm154, %v142, 0
    %158 = vmatprep.subr.mxu0 0.0
    %159 = vmatpush1.msra.mxu0 0.0
    %160 = vmatprep.subr.mxu0 0.0
    %161 = vmatpush1.msra.mxu0 0.0
    %162 = vmatprep.subr.mxu0 0.0
    %163 = vmatpush1.msra.mxu0 0.0
    %164 = vmatprep.subr.mxu0 0.0
    %165 = vmatpush1.msra.mxu0 0.0
    %166 = vmatprep.subr.mxu0 0.0
    %167 = vmatpush1.msra.mxu0 0.0
    %168 = vmatprep.subr.mxu0 0.0
    %169 = vmatpush1.msra.mxu0 0.0
    %170 = vmatprep.subr.mxu0 0.0
    %171 = vmatpush1.msra.mxu0 0.0
    %172 = vmatprep.subr.mxu0 0.0
    %173 = vmatpush1.msra.mxu0 0.0
    %174 = vmatprep.subr.mxu0 0.0
    %175 = vmatpush1.msra.mxu0 0.0
    %176 = vmatprep.subr.mxu0 0.0
    %177 = vmatpush1.msra.mxu0 0.0
    %178 = vmatprep.subr.mxu0 0.0
    %179 = vmatpush1.msra.mxu0 0.0
    %180 = vmatprep.subr.mxu0 0.0
    %181 = vmatpush1.msra.mxu0 0.0
    %182 = vmatprep.subr.mxu0 0.0
    %183 = vmatpush1.msra.mxu0 %v146
    %184 = vmatprep.subr.mxu0 0.0
    %185 = vmatpush1.msra.mxu0 %v145
    %186 = vmatprep.subr.mxu0 0.0
    %187 = vmatpush1.msra.mxu0 %v144
    %188 = vmatprep.subr.mxu0 0.0
    %189 = vmatpush1.msra.mxu0 %v143
    %190 = vmatprep.subr.mxu0 0.0
    %191 = vmatpush2.msra.mxu0 0.0
    %192 = vmatprep.subr.mxu0 0.0
    %193 = vmatpush2.msra.mxu0 0.0
    %194 = vmatprep.subr.mxu0 0.0
    %195 = vmatpush2.msra.mxu0 0.0
    %196 = vmatprep.subr.mxu0 0.0
    %197 = vmatpush2.msra.mxu0 0.0
    %198 = vmatprep.subr.mxu0 0.0
    %199 = vmatpush2.msra.mxu0 0.0
    %200 = vmatprep.subr.mxu0 0.0
    %201 = vmatpush2.msra.mxu0 0.0
    %202 = vmatprep.subr.mxu0 0.0
    %203 = vmatpush2.msra.mxu0 0.0
    %204 = vmatprep.subr.mxu0 0.0
    %205 = vmatpush2.msra.mxu0 0.0
    %206 = vmatprep.subr.mxu0 0.0
    %207 = vmatpush2.msra.mxu0 0.0
    %208 = vmatprep.subr.mxu0 0.0
    %209 = vmatpush2.msra.mxu0 0.0
    %210 = vmatprep.subr.mxu0 0.0
    %211 = vmatpush2.msra.mxu0 0.0
    %212 = vmatprep.subr.mxu0 0.0
    %213 = vmatpush2.msra.mxu0 0.0
    %214 = vmatprep.subr.mxu0 0.0
    %215 = vmatpush2.msra.mxu0 0.0
    %216 = vmatprep.subr.mxu0 0.0
    %217 = vmatpush2.msra.mxu0 0.0
    %218 = vmatprep.subr.mxu0 0.0
    %219 = vmatpush2.msra.mxu0 0.0
    %220 = vmatprep.subr.mxu0 0.0
    %221 = vmatpush2.msra.mxu0 0.0
    %222 = vmatprep.mubr.f32.mxu0 0.0
    %223 = vmatmul.mubr.f32.gmra.mxu0 %v156
    %v224 = vpop.f32.mrf.mxu0
    %v225 = vadd.f32 %v152, %v224
    %v226 = vpop.f32.mrf.mxu0
    %227 = vdwg.mxu0
    %v228 = vmax.f32 %v225, 0.0
    %v229 = vld [vmem:[#allocation5] sm:$0xff]
    %v230 = vld [vmem:[#allocation5 + $0x8] sm:$0xff]
    %v231 = vld [vmem:[#allocation5 + $0x10] sm:$0xff]
    %v232 = vld [vmem:[#allocation5 + $0x18] sm:$0xff]
    %v233 = vld [vmem:[%s6] sm:$0x1]
    %v235 = vlaneseq
    %v236 = vshrl.u32 %v235, 7
    %v237 = vsub.s32 0, %v236
    %v238 = vrot.slane %v233, %v237
    %v241 = vsel %vm154, %v228, 0
    %243 = vmatprep.subr.mxu0 0.0
    %244 = vmatpush1.msra.mxu0 0.0
    %245 = vmatprep.subr.mxu0 0.0
    %246 = vmatpush1.msra.mxu0 0.0
    %247 = vmatprep.subr.mxu0 0.0
    %248 = vmatpush1.msra.mxu0 0.0
    %249 = vmatprep.subr.mxu0 0.0
    %250 = vmatpush1.msra.mxu0 0.0
    %251 = vmatprep.subr.mxu0 0.0
    %252 = vmatpush1.msra.mxu0 0.0
    %253 = vmatprep.subr.mxu0 0.0
    %254 = vmatpush1.msra.mxu0 0.0
    %255 = vmatprep.subr.mxu0 0.0
    %256 = vmatpush1.msra.mxu0 0.0
    %257 = vmatprep.subr.mxu0 0.0
    %258 = vmatpush1.msra.mxu0 0.0
    %259 = vmatprep.subr.mxu0 0.0
    %260 = vmatpush1.msra.mxu0 0.0
    %261 = vmatprep.subr.mxu0 0.0
    %262 = vmatpush1.msra.mxu0 0.0
    %263 = vmatprep.subr.mxu0 0.0
    %264 = vmatpush1.msra.mxu0 0.0
    %265 = vmatprep.subr.mxu0 0.0
    %266 = vmatpush1.msra.mxu0 0.0
    %267 = vmatprep.subr.mxu0 0.0
    %268 = vmatpush1.msra.mxu0 %v232
    %269 = vmatprep.subr.mxu0 0.0
    %270 = vmatpush1.msra.mxu0 %v231
    %271 = vmatprep.subr.mxu0 0.0
    %272 = vmatpush1.msra.mxu0 %v230
    %273 = vmatprep.subr.mxu0 0.0
    %274 = vmatpush1.msra.mxu0 %v229
    %275 = vmatprep.subr.mxu0 0.0
    %276 = vmatpush2.msra.mxu0 0.0
    %277 = vmatprep.subr.mxu0 0.0
    %278 = vmatpush2.msra.mxu0 0.0
    %279 = vmatprep.subr.mxu0 0.0
    %280 = vmatpush2.msra.mxu0 0.0
    %281 = vmatprep.subr.mxu0 0.0
    %282 = vmatpush2.msra.mxu0 0.0
    %283 = vmatprep.subr.mxu0 0.0
    %284 = vmatpush2.msra.mxu0 0.0
    %285 = vmatprep.subr.mxu0 0.0
    %286 = vmatpush2.msra.mxu0 0.0
    %287 = vmatprep.subr.mxu0 0.0
    %288 = vmatpush2.msra.mxu0 0.0
    %289 = vmatprep.subr.mxu0 0.0
    %290 = vmatpush2.msra.mxu0 0.0
    %291 = vmatprep.subr.mxu0 0.0
    %292 = vmatpush2.msra.mxu0 0.0
    %293 = vmatprep.subr.mxu0 0.0
    %294 = vmatpush2.msra.mxu0 0.0
    %295 = vmatprep.subr.mxu0 0.0
    %296 = vmatpush2.msra.mxu0 0.0
    %297 = vmatprep.subr.mxu0 0.0
    %298 = vmatpush2.msra.mxu0 0.0
    %299 = vmatprep.subr.mxu0 0.0
    %300 = vmatpush2.msra.mxu0 0.0
    %301 = vmatprep.subr.mxu0 0.0
    %302 = vmatpush2.msra.mxu0 0.0
    %303 = vmatprep.subr.mxu0 0.0
    %304 = vmatpush2.msra.mxu0 0.0
    %305 = vmatprep.subr.mxu0 0.0
    %306 = vmatpush2.msra.mxu0 0.0
    %307 = vmatprep.mubr.f32.mxu0 0.0
    %308 = vmatmul.mubr.f32.gmra.mxu0 %v241
    %v309 = vpop.f32.mrf.mxu0
    %v310 = vadd.f32 %v238, %v309
    %v311 = vpop.f32.mrf.mxu0
    %312 = vdwg.mxu0
    %v313 = vtanh.pop %v310
    %v314 = vld [vmem:[%s7] sm:$0xff]
    %v315 = vld [vmem:[%s7 + $0x8] sm:$0xff]
    %v316 = vld [vmem:[%s7 + $0x10] sm:$0xff]
    %v317 = vld [vmem:[%s7 + $0x18] sm:$0xff]
    %v318 = vld [vmem:[%s8] sm:$0x1]
    %v320 = vlaneseq
    %v321 = vshrl.u32 %v320, 7
    %v322 = vsub.s32 0, %v321
    %v323 = vrot.slane %v318, %v322
    %v326 = vsel %vm154, %v313, 0
    %328 = vmatprep.subr.mxu0 0.0
    %329 = vmatpush1.msra.mxu0 0.0
    %330 = vmatprep.subr.mxu0 0.0
    %331 = vmatpush1.msra.mxu0 0.0
    %332 = vmatprep.subr.mxu0 0.0
    %333 = vmatpush1.msra.mxu0 0.0
    %334 = vmatprep.subr.mxu0 0.0
    %335 = vmatpush1.msra.mxu0 0.0
    %336 = vmatprep.subr.mxu0 0.0
    %337 = vmatpush1.msra.mxu0 0.0
    %338 = vmatprep.subr.mxu0 0.0
    %339 = vmatpush1.msra.mxu0 0.0
    %340 = vmatprep.subr.mxu0 0.0
    %341 = vmatpush1.msra.mxu0 0.0
    %342 = vmatprep.subr.mxu0 0.0
    %343 = vmatpush1.msra.mxu0 0.0
    %344 = vmatprep.subr.mxu0 0.0
    %345 = vmatpush1.msra.mxu0 0.0
    %346 = vmatprep.subr.mxu0 0.0
    %347 = vmatpush1.msra.mxu0 0.0
    %348 = vmatprep.subr.mxu0 0.0
    %349 = vmatpush1.msra.mxu0 0.0
    %350 = vmatprep.subr.mxu0 0.0
    %351 = vmatpush1.msra.mxu0 0.0
    %352 = vmatprep.subr.mxu0 0.0
    %353 = vmatpush1.msra.mxu0 %v317
    %354 = vmatprep.subr.mxu0 0.0
    %355 = vmatpush1.msra.mxu0 %v316
    %356 = vmatprep.subr.mxu0 0.0
    %357 = vmatpush1.msra.mxu0 %v315
    %358 = vmatprep.subr.mxu0 0.0
    %359 = vmatpush1.msra.mxu0 %v314
    %360 = vmatprep.subr.mxu0 0.0
    %361 = vmatpush2.msra.mxu0 0.0
    %362 = vmatprep.subr.mxu0 0.0
    %363 = vmatpush2.msra.mxu0 0.0
    %364 = vmatprep.subr.mxu0 0.0
    %365 = vmatpush2.msra.mxu0 0.0
    %366 = vmatprep.subr.mxu0 0.0
    %367 = vmatpush2.msra.mxu0 0.0
    %368 = vmatprep.subr.mxu0 0.0
    %369 = vmatpush2.msra.mxu0 0.0
    %370 = vmatprep.subr.mxu0 0.0
    %371 = vmatpush2.msra.mxu0 0.0
    %372 = vmatprep.subr.mxu0 0.0
    %373 = vmatpush2.msra.mxu0 0.0
    %374 = vmatprep.subr.mxu0 0.0
    %375 = vmatpush2.msra.mxu0 0.0
    %376 = vmatprep.subr.mxu0 0.0
    %377 = vmatpush2.msra.mxu0 0.0
    %378 = vmatprep.subr.mxu0 0.0
    %379 = vmatpush2.msra.mxu0 0.0
    %380 = vmatprep.subr.mxu0 0.0
    %381 = vmatpush2.msra.mxu0 0.0
    %382 = vmatprep.subr.mxu0 0.0
    %383 = vmatpush2.msra.mxu0 0.0
    %384 = vmatprep.subr.mxu0 0.0
    %385 = vmatpush2.msra.mxu0 0.0
    %386 = vmatprep.subr.mxu0 0.0
    %387 = vmatpush2.msra.mxu0 0.0
    %388 = vmatprep.subr.mxu0 0.0
    %389 = vmatpush2.msra.mxu0 0.0
    %390 = vmatprep.subr.mxu0 0.0
    %391 = vmatpush2.msra.mxu0 0.0
    %392 = vmatprep.mubr.f32.mxu0 0.0
    %393 = vmatmul.mubr.f32.gmra.mxu0 %v326
    %v394 = vpop.f32.mrf.mxu0
    %v395 = vadd.f32 %v323, %v394
    %v396 = vpop.f32.mrf.mxu0
    %397 = vdwg.mxu0
    %398 = vst.msk [vmem:[#allocation7] sm:$0xff] %vm68, %v395
    // Predicated region
    $region46: #{tpu_custom_call.1} parent=1 // pred_check
      _
    $region47: #{tpu_custom_call.1} parent=1 // pred_check_branch
      %400 = sbr.rel (0) target = $region49
    $region48: #{tpu_custom_call.1} parent=1 // pred_region
      %s402 = ssub.s32 128, 128
      %403 = vsyncadd [#allocation4], %s402
      %s405 = sshll.u32 [#allocation7], 4
      %s406 = int_to_ptr.vmem [resolvable:$true] %s405
      %408 = dma.vmem_to_hbm [thread:$0]  %s406, 128, %s9, [#allocation4]
    $region49: #{tpu_custom_call.1} parent=1 // pred_fallthru
      _
    // Predicated region
    $region50: #{tpu_custom_call.1} parent=1 // pred_check
      _
    $region51: #{tpu_custom_call.1} parent=1 // pred_check_branch
      %410 = sbr.rel (0) target = $region53
    $region52: #{tpu_custom_call.1} parent=1 // pred_region
      %411 = dma.done [#allocation4], 128
    $region53: #{tpu_custom_call.1} parent=1 // pred_fallthru
      _
    %412 = vsyncpa [#allocation3], 1
    %413 = vsyncpa [#allocation6], 1
    %414 = vsyncpa [#allocation4], 1

</llo_original>
